<compile_context>
chip_gen: v5e
topology: v5e:2x2
jax: 0.10.0
libtpu: 0.0.40
codegen_flags: <defaults>
</compile_context>

<pallas_src>
import functools

import jax
import jax.numpy as jnp
from jax.experimental import pallas as pl
from jax.experimental.pallas import tpu as pltpu

EPS = 1e-5        # nn.LayerNorm default
LANE = 128        # TPU lane width
SUBLANE = 8       # f32 sublane count


def _round_up(x, m):
    return (x + m - 1) // m * m


def _pad2(a, rows, cols):
    r, c = a.shape
    return jnp.pad(a, ((0, rows - r), (0, cols - c)))


def _ln_stats(x, d_true):
    """Mean and 1/sqrt(var+eps) over the last axis, ignoring zero-padded lanes.

    Padded lanes of `x` are zero by construction, so the row sum is already
    correct; the variance uses an explicit (compile-time) lane mask so the
    (0 - mean) contribution of padded lanes is excluded.  This reproduces the
    unpadded PyTorch LayerNorm (biased variance) exactly.
    """
    d_pad = x.shape[-1]
    mean = jnp.sum(x, axis=-1, keepdims=True) * (1.0 / d_true)
    centered = x - mean
    if d_pad != d_true:
        mask = jax.lax.broadcasted_iota(jnp.int32, (1, d_pad), 1) < d_true
        centered = jnp.where(mask, centered, 0.0)
    var = jnp.sum(centered * centered, axis=-1, keepdims=True) * (1.0 / d_true)
    inv = jax.lax.rsqrt(var + EPS)
    return mean, inv


def actor_kernel(
    state_ref,
    w1_ref, b1_ref, ln1_w_ref, ln1_b_ref,
    w2_ref, b2_ref, ln2_w_ref, ln2_b_ref,
    w3_ref, b3_ref,
    out_ref,
    *, d_in, d_fc1, d_fc2,
):
    x = state_ref[...]
    if x.dtype != jnp.float32:          # no-op convert skipped for f32 inputs
        x = x.astype(jnp.float32)

    # bn0: gamma0/beta0 were folded into w1/b1 at prep time -> normalize only.
    mean, inv = _ln_stats(x, d_in)
    x = (x - mean) * inv

    # fc1 (MXU; operands may be bf16, accumulate f32)
    w1 = w1_ref[...]
    x = jnp.dot(x.astype(w1.dtype), w1,
                preferred_element_type=jnp.float32) + b1_ref[...]

    # bn1 -> relu   (padded lanes stay 0 because padded gamma/beta are 0)
    mean, inv = _ln_stats(x, d_fc1)
    x = jnp.maximum((x - mean) * inv * ln1_w_ref[...] + ln1_b_ref[...], 0.0)

    # fc2
    w2 = w2_ref[...]
    x = jnp.dot(x.astype(w2.dtype), w2,
                preferred_element_type=jnp.float32) + b2_ref[...]

    # bn2 -> relu
    mean, inv = _ln_stats(x, d_fc2)
    x = jnp.maximum((x - mean) * inv * ln2_w_ref[...] + ln2_b_ref[...], 0.0)

    # mu -> tanh (lane-dense padded output; padded lanes are tanh(0)=0)
    w3 = w3_ref[...]
    x = jnp.dot(x.astype(w3.dtype), w3,
                preferred_element_type=jnp.float32) + b3_ref[...]
    out_ref[...] = jnp.tanh(x).astype(out_ref.dtype)


def init_params(key, input_dims, fc1_dims, fc2_dims, n_actions):
    """Deterministic init mirroring the PyTorch __init__ (uniform ranges).

    Linear weights are stored transposed: (in_features, out_features).
    LayerNorm params default to weight=1, bias=0.  Kept 2D (1, dim) for TPU.
    """
    k1, k2, k3, k4, k5, k6 = jax.random.split(key, 6)
    f1 = 1.0 / jnp.sqrt(jnp.float32(fc1_dims))   # 1/sqrt(fc1.weight.size(0))
    f2 = 1.0 / jnp.sqrt(jnp.float32(fc2_dims))
    f3 = 0.003

    def unif(k, shape, bound):
        return jax.random.uniform(k, shape, jnp.float32, -bound, bound)

    return {
        "ln0_w": jnp.ones((1, input_dims), jnp.float32),
        "ln0_b": jnp.zeros((1, input_dims), jnp.float32),
        "w1": unif(k1, (input_dims, fc1_dims), f1),
        "b1": unif(k2, (1, fc1_dims), f1),
        "ln1_w": jnp.ones((1, fc1_dims), jnp.float32),
        "ln1_b": jnp.zeros((1, fc1_dims), jnp.float32),
        "w2": unif(k3, (fc1_dims, fc2_dims), f2),
        "b2": unif(k4, (1, fc2_dims), f2),
        "ln2_w": jnp.ones((1, fc2_dims), jnp.float32),
        "ln2_b": jnp.zeros((1, fc2_dims), jnp.float32),
        "w3": unif(k5, (fc2_dims, n_actions), f3),
        "b3": unif(k6, (1, n_actions), f3),
    }


def prepare_params(params, matmul_dtype=jnp.float32):
    """One-time weight prep: fold bn0 affine into fc1, pad dims to 128 lanes.

    matmul_dtype=jnp.bfloat16 enables the bf16 MXU path on v6e/v7x; default
    f32 matches the PyTorch reference bit-for-bit in structure.
    """
    d_in, d1 = params["w1"].shape
    d2 = params["w2"].shape[1]
    na = params["w3"].shape[1]

    # LN0(x) @ W1 + b1 == normalize(x) @ (gamma0[:,None]*W1) + (b1 + beta0@W1)
    # (legal because there is no ReLU between bn0 and fc1).
    w1 = params["ln0_w"].reshape(-1, 1) * params["w1"]
    b1 = params["b1"] + params["ln0_b"] @ params["w1"]

    d_in_p, d1_p, d2_p, na_p = (_round_up(d, LANE) for d in (d_in, d1, d2, na))

    return {
        # zero-padding LN gamma/beta keeps padded lanes at exactly 0 downstream
        "w1": _pad2(w1, d_in_p, d1_p).astype(matmul_dtype),
        "b1": _pad2(b1, 1, d1_p),
        "ln1_w": _pad2(params["ln1_w"], 1, d1_p),
        "ln1_b": _pad2(params["ln1_b"], 1, d1_p),
        "w2": _pad2(params["w2"], d1_p, d2_p).astype(matmul_dtype),
        "b2": _pad2(params["b2"], 1, d2_p),
        "ln2_w": _pad2(params["ln2_w"], 1, d2_p),
        "ln2_b": _pad2(params["ln2_b"], 1, d2_p),
        "w3": _pad2(params["w3"], d2_p, na_p).astype(matmul_dtype),
        "b3": _pad2(params["b3"], 1, na_p),
        "dims": (d_in, d1, d2, na),
    }


def actor_forward(state, prepared, *, block_b=512):
    """state: (B, input_dims). prepared: output of prepare_params."""
    d_in, d1, d2, na = prepared["dims"]
    B = state.shape[0]
    d_in_p, d1_p = prepared["w1"].shape
    d2_p = prepared["w2"].shape[1]
    na_p = prepared["w3"].shape[1]

    # Batch tile: multiple of 8 sublanes.  TB=512 keeps double-buffered
    # (state, out) tiles + resident params far under the 32 MiB default scoped
    # VMEM, so it is safe on v7x (64 MiB physical) as well as v5e/v6e.
    b_pad = _round_up(B, SUBLANE)
    tb = min(block_b, b_pad)
    b_pad = _round_up(b_pad, tb)

    state_p = jnp.pad(state.astype(jnp.float32),
                      ((0, b_pad - B), (0, d_in_p - d_in)))

    weights = (
        prepared["w1"], prepared["b1"],
        prepared["ln1_w"], prepared["ln1_b"],
        prepared["w2"], prepared["b2"],
        prepared["ln2_w"], prepared["ln2_b"],
        prepared["w3"], prepared["b3"],
    )

    # state / out stream across the batch grid; all parameters use a constant
    # index_map so they are fetched once and stay resident in VMEM.
    in_specs = [pl.BlockSpec((tb, d_in_p), lambda i: (i, 0))]
    in_specs += [pl.BlockSpec(w.shape, lambda i: (0, 0)) for w in weights]

    flops = 2 * b_pad * (d_in_p * d1_p + d1_p * d2_p + d2_p * na_p)
    bytes_accessed = 4 * b_pad * (d_in_p + na_p) + sum(
        int(w.size) * w.dtype.itemsize for w in weights)
    cost = pl.CostEstimate(
        flops=int(flops),
        transcendentals=int(b_pad * (3 + na_p)),   # 3 rsqrt/row + tanh lanes
        bytes_accessed=int(bytes_accessed),
    )

    kernel = functools.partial(actor_kernel, d_in=d_in, d_fc1=d1, d_fc2=d2)

    out_p = pl.pallas_call(
        kernel,
        out_shape=jax.ShapeDtypeStruct((b_pad, na_p), jnp.float32),
        grid=(b_pad // tb,),
        in_specs=in_specs,
        out_specs=pl.BlockSpec((tb, na_p), lambda i: (i, 0)),
        compiler_params=pltpu.CompilerParams(
            dimension_semantics=("parallel",)),
        cost_estimate=cost,
    )(state_p, *weights)

    return out_p[:B, :na]


def reference_forward(state, params):
    """Pure-JAX reference (original, unfolded, unpadded params)."""
    def ln(x, g, b):
        mean = jnp.mean(x, axis=-1, keepdims=True)
        var = jnp.mean((x - mean) ** 2, axis=-1, keepdims=True)
        return (x - mean) * jax.lax.rsqrt(var + EPS) * g + b

    x = ln(state, params["ln0_w"], params["ln0_b"])
    x = x @ params["w1"] + params["b1"]
    x = jnp.maximum(ln(x, params["ln1_w"], params["ln1_b"]), 0.0)
    x = x @ params["w2"] + params["b2"]
    x = jnp.maximum(ln(x, params["ln2_w"], params["ln2_b"]), 0.0)
    return jnp.tanh(x @ params["w3"] + params["b3"])


if __name__ == "__main__":
    # Small shapes consistent with the module (state-vector MLP).
    batch = 8
    input_dims, fc1_dims, fc2_dims, n_actions = 16, 64, 32, 8

    key = jax.random.PRNGKey(0)
    kp, kx = jax.random.split(key)
    params = init_params(kp, input_dims, fc1_dims, fc2_dims, n_actions)
    state = jax.random.normal(kx, (batch, input_dims), jnp.float32)

    # Default f32 matmuls -> exact PyTorch semantics.  On v6e/v7x one can pass
    # prepare_params(params, matmul_dtype=jnp.bfloat16) for the bf16 MXU path.
    prepared = prepare_params(params)

    out = jax.block_until_ready(actor_forward(state, prepared))

    ref = reference_forward(state, params)
    assert out.shape == (batch, n_actions)
    assert jnp.allclose(out, ref, atol=1e-5, rtol=1e-5), "mismatch vs reference"
    print("KERNEL_OK")
</pallas_src>

<mosaic_0001>
module attributes {stable_mosaic.version = 11 : i64} {
  func.func @actor_kernel(%arg0: i32, %arg1: memref<8x128xf32, #tpu.memory_space<vmem>>, %arg2: memref<128x128xf32, #tpu.memory_space<vmem>>, %arg3: memref<1x128xf32, #tpu.memory_space<vmem>>, %arg4: memref<1x128xf32, #tpu.memory_space<vmem>>, %arg5: memref<1x128xf32, #tpu.memory_space<vmem>>, %arg6: memref<128x128xf32, #tpu.memory_space<vmem>>, %arg7: memref<1x128xf32, #tpu.memory_space<vmem>>, %arg8: memref<1x128xf32, #tpu.memory_space<vmem>>, %arg9: memref<1x128xf32, #tpu.memory_space<vmem>>, %arg10: memref<128x128xf32, #tpu.memory_space<vmem>>, %arg11: memref<1x128xf32, #tpu.memory_space<vmem>>, %arg12: memref<8x128xf32, #tpu.memory_space<vmem>>) attributes {dimension_semantics = [#tpu.dimension_semantics<parallel>], iteration_bounds = array<i64: 1>, scalar_prefetch = 0 : i64, scratch_operands = 0 : i64, tpu.core_type = #tpu.core_type<tc>, window_params = [{transform_indices = @transform_0, window_bounds = array<i64: 8, 128>}, {pipeline_mode = #tpu.pipeline_mode<synchronous>, transform_indices = @transform_1, window_bounds = array<i64: 128, 128>}, {pipeline_mode = #tpu.pipeline_mode<synchronous>, transform_indices = @transform_2, window_bounds = array<i64: 1, 128>}, {pipeline_mode = #tpu.pipeline_mode<synchronous>, transform_indices = @transform_3, window_bounds = array<i64: 1, 128>}, {pipeline_mode = #tpu.pipeline_mode<synchronous>, transform_indices = @transform_4, window_bounds = array<i64: 1, 128>}, {pipeline_mode = #tpu.pipeline_mode<synchronous>, transform_indices = @transform_5, window_bounds = array<i64: 128, 128>}, {pipeline_mode = #tpu.pipeline_mode<synchronous>, transform_indices = @transform_6, window_bounds = array<i64: 1, 128>}, {pipeline_mode = #tpu.pipeline_mode<synchronous>, transform_indices = @transform_7, window_bounds = array<i64: 1, 128>}, {pipeline_mode = #tpu.pipeline_mode<synchronous>, transform_indices = @transform_8, window_bounds = array<i64: 1, 128>}, {pipeline_mode = #tpu.pipeline_mode<synchronous>, transform_indices = @transform_9, window_bounds = array<i64: 128, 128>}, {pipeline_mode = #tpu.pipeline_mode<synchronous>, transform_indices = @transform_10, window_bounds = array<i64: 1, 128>}, {transform_indices = @transform_11, window_bounds = array<i64: 8, 128>}]} {
    %c0 = arith.constant 0 : index
    %c0_0 = arith.constant 0 : index
    %0 = vector.load %arg1[%c0, %c0_0] : memref<8x128xf32, #tpu.memory_space<vmem>>, vector<8x128xf32>
    %cst = arith.constant dense<0.000000e+00> : vector<8xf32>
    %1 = vector.multi_reduction <add>, %0, %cst [1] : vector<8x128xf32> to vector<8xf32>
    %2 = vector.shape_cast %1 : vector<8xf32> to vector<8x1xf32>
    %cst_1 = arith.constant 6.250000e-02 : f32
    %3 = vector.broadcast %cst_1 : f32 to vector<8x1xf32>
    %4 = arith.mulf %2, %3 : vector<8x1xf32>
    %5 = vector.broadcast %4 : vector<8x1xf32> to vector<8x128xf32>
    %6 = arith.subf %0, %5 : vector<8x128xf32>
    %7 = tpu.iota {dimensions = array<i32: 1>} : vector<1x128xi32>
    %c16_i32 = arith.constant 16 : i32
    %8 = vector.broadcast %c16_i32 : i32 to vector<1x128xi32>
    %9 = arith.cmpi slt, %7, %8 : vector<1x128xi32>
    %cst_2 = arith.constant 0.000000e+00 : f32
    %10 = vector.shape_cast %9 : vector<1x128xi1> to vector<1x128xi1>
    %11 = vector.broadcast %10 : vector<1x128xi1> to vector<8x128xi1>
    %12 = vector.broadcast %cst_2 : f32 to vector<8x128xf32>
    %13 = arith.select %11, %6, %12 : vector<8x128xi1>, vector<8x128xf32>
    %14 = arith.mulf %13, %13 : vector<8x128xf32>
    %cst_3 = arith.constant dense<0.000000e+00> : vector<8xf32>
    %15 = vector.multi_reduction <add>, %14, %cst_3 [1] : vector<8x128xf32> to vector<8xf32>
    %16 = vector.shape_cast %15 : vector<8xf32> to vector<8x1xf32>
    %cst_4 = arith.constant 6.250000e-02 : f32
    %17 = vector.broadcast %cst_4 : f32 to vector<8x1xf32>
    %18 = arith.mulf %16, %17 : vector<8x1xf32>
    %cst_5 = arith.constant 9.99999974E-6 : f32
    %19 = vector.broadcast %cst_5 : f32 to vector<8x1xf32>
    %20 = arith.addf %18, %19 : vector<8x1xf32>
    %21 = math.rsqrt %20 : vector<8x1xf32>
    %22 = vector.broadcast %4 : vector<8x1xf32> to vector<8x128xf32>
    %23 = arith.subf %0, %22 : vector<8x128xf32>
    %24 = vector.broadcast %21 : vector<8x1xf32> to vector<8x128xf32>
    %25 = arith.mulf %23, %24 : vector<8x128xf32>
    %c0_6 = arith.constant 0 : index
    %c0_7 = arith.constant 0 : index
    %26 = vector.load %arg2[%c0_6, %c0_7] : memref<128x128xf32, #tpu.memory_space<vmem>>, vector<128x128xf32>
    %cst_8 = arith.constant dense<0.000000e+00> : vector<8x128xf32>
    %27 = tpu.matmul %25, %26, %cst_8 {dimension_numbers = #tpu.dot_dimension_numbers<[1], [0], [0], [1], [0, 0, 1, 1], [], []>} : vector<8x128xf32>, vector<128x128xf32>, vector<8x128xf32> -> vector<8x128xf32>
    %c0_9 = arith.constant 0 : index
    %c0_10 = arith.constant 0 : index
    %28 = vector.load %arg3[%c0_9, %c0_10] : memref<1x128xf32, #tpu.memory_space<vmem>>, vector<1x128xf32>
    %29 = vector.broadcast %28 : vector<1x128xf32> to vector<8x128xf32>
    %30 = arith.addf %27, %29 : vector<8x128xf32>
    %cst_11 = arith.constant dense<0.000000e+00> : vector<8xf32>
    %31 = vector.multi_reduction <add>, %30, %cst_11 [1] : vector<8x128xf32> to vector<8xf32>
    %32 = vector.shape_cast %31 : vector<8xf32> to vector<8x1xf32>
    %cst_12 = arith.constant 1.562500e-02 : f32
    %33 = vector.broadcast %cst_12 : f32 to vector<8x1xf32>
    %34 = arith.mulf %32, %33 : vector<8x1xf32>
    %35 = vector.broadcast %34 : vector<8x1xf32> to vector<8x128xf32>
    %36 = arith.subf %30, %35 : vector<8x128xf32>
    %37 = tpu.iota {dimensions = array<i32: 1>} : vector<1x128xi32>
    %c64_i32 = arith.constant 64 : i32
    %38 = vector.broadcast %c64_i32 : i32 to vector<1x128xi32>
    %39 = arith.cmpi slt, %37, %38 : vector<1x128xi32>
    %cst_13 = arith.constant 0.000000e+00 : f32
    %40 = vector.shape_cast %39 : vector<1x128xi1> to vector<1x128xi1>
    %41 = vector.broadcast %40 : vector<1x128xi1> to vector<8x128xi1>
    %42 = vector.broadcast %cst_13 : f32 to vector<8x128xf32>
    %43 = arith.select %41, %36, %42 : vector<8x128xi1>, vector<8x128xf32>
    %44 = arith.mulf %43, %43 : vector<8x128xf32>
    %cst_14 = arith.constant dense<0.000000e+00> : vector<8xf32>
    %45 = vector.multi_reduction <add>, %44, %cst_14 [1] : vector<8x128xf32> to vector<8xf32>
    %46 = vector.shape_cast %45 : vector<8xf32> to vector<8x1xf32>
    %cst_15 = arith.constant 1.562500e-02 : f32
    %47 = vector.broadcast %cst_15 : f32 to vector<8x1xf32>
    %48 = arith.mulf %46, %47 : vector<8x1xf32>
    %cst_16 = arith.constant 9.99999974E-6 : f32
    %49 = vector.broadcast %cst_16 : f32 to vector<8x1xf32>
    %50 = arith.addf %48, %49 : vector<8x1xf32>
    %51 = math.rsqrt %50 : vector<8x1xf32>
    %52 = vector.broadcast %34 : vector<8x1xf32> to vector<8x128xf32>
    %53 = arith.subf %30, %52 : vector<8x128xf32>
    %54 = vector.broadcast %51 : vector<8x1xf32> to vector<8x128xf32>
    %55 = arith.mulf %53, %54 : vector<8x128xf32>
    %c0_17 = arith.constant 0 : index
    %c0_18 = arith.constant 0 : index
    %56 = vector.load %arg4[%c0_17, %c0_18] : memref<1x128xf32, #tpu.memory_space<vmem>>, vector<1x128xf32>
    %57 = vector.broadcast %56 : vector<1x128xf32> to vector<8x128xf32>
    %58 = arith.mulf %55, %57 : vector<8x128xf32>
    %c0_19 = arith.constant 0 : index
    %c0_20 = arith.constant 0 : index
    %59 = vector.load %arg5[%c0_19, %c0_20] : memref<1x128xf32, #tpu.memory_space<vmem>>, vector<1x128xf32>
    %60 = vector.broadcast %59 : vector<1x128xf32> to vector<8x128xf32>
    %61 = arith.addf %58, %60 : vector<8x128xf32>
    %cst_21 = arith.constant 0.000000e+00 : f32
    %62 = vector.broadcast %cst_21 : f32 to vector<8x128xf32>
    %63 = arith.maximumf %61, %62 : vector<8x128xf32>
    %c0_22 = arith.constant 0 : index
    %c0_23 = arith.constant 0 : index
    %64 = vector.load %arg6[%c0_22, %c0_23] : memref<128x128xf32, #tpu.memory_space<vmem>>, vector<128x128xf32>
    %cst_24 = arith.constant dense<0.000000e+00> : vector<8x128xf32>
    %65 = tpu.matmul %63, %64, %cst_24 {dimension_numbers = #tpu.dot_dimension_numbers<[1], [0], [0], [1], [0, 0, 1, 1], [], []>} : vector<8x128xf32>, vector<128x128xf32>, vector<8x128xf32> -> vector<8x128xf32>
    %c0_25 = arith.constant 0 : index
    %c0_26 = arith.constant 0 : index
    %66 = vector.load %arg7[%c0_25, %c0_26] : memref<1x128xf32, #tpu.memory_space<vmem>>, vector<1x128xf32>
    %67 = vector.broadcast %66 : vector<1x128xf32> to vector<8x128xf32>
    %68 = arith.addf %65, %67 : vector<8x128xf32>
    %cst_27 = arith.constant dense<0.000000e+00> : vector<8xf32>
    %69 = vector.multi_reduction <add>, %68, %cst_27 [1] : vector<8x128xf32> to vector<8xf32>
    %70 = vector.shape_cast %69 : vector<8xf32> to vector<8x1xf32>
    %cst_28 = arith.constant 3.125000e-02 : f32
    %71 = vector.broadcast %cst_28 : f32 to vector<8x1xf32>
    %72 = arith.mulf %70, %71 : vector<8x1xf32>
    %73 = vector.broadcast %72 : vector<8x1xf32> to vector<8x128xf32>
    %74 = arith.subf %68, %73 : vector<8x128xf32>
    %75 = tpu.iota {dimensions = array<i32: 1>} : vector<1x128xi32>
    %c32_i32 = arith.constant 32 : i32
    %76 = vector.broadcast %c32_i32 : i32 to vector<1x128xi32>
    %77 = arith.cmpi slt, %75, %76 : vector<1x128xi32>
    %cst_29 = arith.constant 0.000000e+00 : f32
    %78 = vector.shape_cast %77 : vector<1x128xi1> to vector<1x128xi1>
    %79 = vector.broadcast %78 : vector<1x128xi1> to vector<8x128xi1>
    %80 = vector.broadcast %cst_29 : f32 to vector<8x128xf32>
    %81 = arith.select %79, %74, %80 : vector<8x128xi1>, vector<8x128xf32>
    %82 = arith.mulf %81, %81 : vector<8x128xf32>
    %cst_30 = arith.constant dense<0.000000e+00> : vector<8xf32>
    %83 = vector.multi_reduction <add>, %82, %cst_30 [1] : vector<8x128xf32> to vector<8xf32>
    %84 = vector.shape_cast %83 : vector<8xf32> to vector<8x1xf32>
    %cst_31 = arith.constant 3.125000e-02 : f32
    %85 = vector.broadcast %cst_31 : f32 to vector<8x1xf32>
    %86 = arith.mulf %84, %85 : vector<8x1xf32>
    %cst_32 = arith.constant 9.99999974E-6 : f32
    %87 = vector.broadcast %cst_32 : f32 to vector<8x1xf32>
    %88 = arith.addf %86, %87 : vector<8x1xf32>
    %89 = math.rsqrt %88 : vector<8x1xf32>
    %90 = vector.broadcast %72 : vector<8x1xf32> to vector<8x128xf32>
    %91 = arith.subf %68, %90 : vector<8x128xf32>
    %92 = vector.broadcast %89 : vector<8x1xf32> to vector<8x128xf32>
    %93 = arith.mulf %91, %92 : vector<8x128xf32>
    %c0_33 = arith.constant 0 : index
    %c0_34 = arith.constant 0 : index
    %94 = vector.load %arg8[%c0_33, %c0_34] : memref<1x128xf32, #tpu.memory_space<vmem>>, vector<1x128xf32>
    %95 = vector.broadcast %94 : vector<1x128xf32> to vector<8x128xf32>
    %96 = arith.mulf %93, %95 : vector<8x128xf32>
    %c0_35 = arith.constant 0 : index
    %c0_36 = arith.constant 0 : index
    %97 = vector.load %arg9[%c0_35, %c0_36] : memref<1x128xf32, #tpu.memory_space<vmem>>, vector<1x128xf32>
    %98 = vector.broadcast %97 : vector<1x128xf32> to vector<8x128xf32>
    %99 = arith.addf %96, %98 : vector<8x128xf32>
    %cst_37 = arith.constant 0.000000e+00 : f32
    %100 = vector.broadcast %cst_37 : f32 to vector<8x128xf32>
    %101 = arith.maximumf %99, %100 : vector<8x128xf32>
    %c0_38 = arith.constant 0 : index
    %c0_39 = arith.constant 0 : index
    %102 = vector.load %arg10[%c0_38, %c0_39] : memref<128x128xf32, #tpu.memory_space<vmem>>, vector<128x128xf32>
    %cst_40 = arith.constant dense<0.000000e+00> : vector<8x128xf32>
    %103 = tpu.matmul %101, %102, %cst_40 {dimension_numbers = #tpu.dot_dimension_numbers<[1], [0], [0], [1], [0, 0, 1, 1], [], []>} : vector<8x128xf32>, vector<128x128xf32>, vector<8x128xf32> -> vector<8x128xf32>
    %c0_41 = arith.constant 0 : index
    %c0_42 = arith.constant 0 : index
    %104 = vector.load %arg11[%c0_41, %c0_42] : memref<1x128xf32, #tpu.memory_space<vmem>>, vector<1x128xf32>
    %105 = vector.broadcast %104 : vector<1x128xf32> to vector<8x128xf32>
    %106 = arith.addf %103, %105 : vector<8x128xf32>
    %107 = math.tanh %106 : vector<8x128xf32>
    %c0_43 = arith.constant 0 : index
    %c0_44 = arith.constant 0 : index
    %108 = vector.load %arg12[%c0_43, %c0_44] : memref<8x128xf32, #tpu.memory_space<vmem>>, vector<8x128xf32>
    tpu.vector_store %arg12[%c0_43, %c0_44], %107 {strides = array<i32>} : memref<8x128xf32, #tpu.memory_space<vmem>>, vector<8x128xf32>,
    return
  }
  func.func @transform_0(%arg0: i32) -> (i32, i32) {
    %c0_i32 = arith.constant 0 : i32
    %c0_i32_0 = arith.constant 0 : i32
    return %arg0, %c0_i32 : i32, i32
  }
  func.func @transform_1(%arg0: i32) -> (i32, i32) {
    %c0_i32 = arith.constant 0 : i32
    %c0_i32_0 = arith.constant 0 : i32
    %c0_i32_1 = arith.constant 0 : i32
    return %c0_i32, %c0_i32_0 : i32, i32
  }
  func.func @transform_2(%arg0: i32) -> (i32, i32) {
    %c0_i32 = arith.constant 0 : i32
    %c0_i32_0 = arith.constant 0 : i32
    %c0_i32_1 = arith.constant 0 : i32
    return %c0_i32, %c0_i32_0 : i32, i32
  }
  func.func @transform_3(%arg0: i32) -> (i32, i32) {
    %c0_i32 = arith.constant 0 : i32
    %c0_i32_0 = arith.constant 0 : i32
    %c0_i32_1 = arith.constant 0 : i32
    return %c0_i32, %c0_i32_0 : i32, i32
  }
  func.func @transform_4(%arg0: i32) -> (i32, i32) {
    %c0_i32 = arith.constant 0 : i32
    %c0_i32_0 = arith.constant 0 : i32
    %c0_i32_1 = arith.constant 0 : i32
    return %c0_i32, %c0_i32_0 : i32, i32
  }
  func.func @transform_5(%arg0: i32) -> (i32, i32) {
    %c0_i32 = arith.constant 0 : i32
    %c0_i32_0 = arith.constant 0 : i32
    %c0_i32_1 = arith.constant 0 : i32
    return %c0_i32, %c0_i32_0 : i32, i32
  }
  func.func @transform_6(%arg0: i32) -> (i32, i32) {
    %c0_i32 = arith.constant 0 : i32
    %c0_i32_0 = arith.constant 0 : i32
    %c0_i32_1 = arith.constant 0 : i32
    return %c0_i32, %c0_i32_0 : i32, i32
  }
  func.func @transform_7(%arg0: i32) -> (i32, i32) {
    %c0_i32 = arith.constant 0 : i32
    %c0_i32_0 = arith.constant 0 : i32
    %c0_i32_1 = arith.constant 0 : i32
    return %c0_i32, %c0_i32_0 : i32, i32
  }
  func.func @transform_8(%arg0: i32) -> (i32, i32) {
    %c0_i32 = arith.constant 0 : i32
    %c0_i32_0 = arith.constant 0 : i32
    %c0_i32_1 = arith.constant 0 : i32
    return %c0_i32, %c0_i32_0 : i32, i32
  }
  func.func @transform_9(%arg0: i32) -> (i32, i32) {
    %c0_i32 = arith.constant 0 : i32
    %c0_i32_0 = arith.constant 0 : i32
    %c0_i32_1 = arith.constant 0 : i32
    return %c0_i32, %c0_i32_0 : i32, i32
  }
  func.func @transform_10(%arg0: i32) -> (i32, i32) {
    %c0_i32 = arith.constant 0 : i32
    %c0_i32_0 = arith.constant 0 : i32
    %c0_i32_1 = arith.constant 0 : i32
    return %c0_i32, %c0_i32_0 : i32, i32
  }
  func.func @transform_11(%arg0: i32) -> (i32, i32) {
    %c0_i32 = arith.constant 0 : i32
    %c0_i32_0 = arith.constant 0 : i32
    return %arg0, %c0_i32 : i32, i32
  }
}

</mosaic_0001>

<llo_original>
// kernel: tpu_custom_call.1
$region0: #{tpu_custom_call.1}
  #allocation0 [shape = 'u32[]', space=smem, size = 0x4, offset = 0x4, fixed_abs, tag = 'smem constant byte address 0x4 - core index']
  #allocation1 [shape = 'u32[72,128]{1,0:T(1,128)}', space=vmem, size = 0x9000, scoped, tag = 'internal scratch']
  %s0 = inlined_call_operand.hbm [shape: f32[8,128], index: 0, kind: input, shape index: {}]
  %s1 = inlined_call_operand.hbm [shape: f32[128,128], index: 1, kind: input, shape index: {}]
  %s2 = inlined_call_operand.vmem [shape: f32[1,128], index: 2, kind: input, shape index: {}]
  %s3 = inlined_call_operand.vmem [shape: f32[1,128], index: 3, kind: input, shape index: {}]
  %s4 = inlined_call_operand.vmem [shape: f32[1,128], index: 4, kind: input, shape index: {}]
  %s5 = inlined_call_operand.hbm [shape: f32[128,128], index: 5, kind: input, shape index: {}]
  %s6 = inlined_call_operand.vmem [shape: f32[1,128], index: 6, kind: input, shape index: {}]
  %s7 = inlined_call_operand.vmem [shape: f32[1,128], index: 7, kind: input, shape index: {}]
  %s8 = inlined_call_operand.vmem [shape: f32[1,128], index: 8, kind: input, shape index: {}]
  %s9 = inlined_call_operand.hbm [shape: f32[128,128], index: 9, kind: input, shape index: {}]
  %s10 = inlined_call_operand.vmem [shape: f32[1,128], index: 10, kind: input, shape index: {}]
  %s11 = inlined_call_operand.hbm [shape: f32[8,128], index: 11, kind: output, shape index: {}]
  %s12 = sld [smem:[#allocation0]]
  $region70: #{tpu_custom_call.1} parent=0
    _
  %s14 = ssub.s32 1, %s12
  %s15 = scalar_select 0, %s14, %s12
  $region1: #{tpu_custom_call.1} parent=0
    #allocation2 [shape = 'u8[4096]{0}', space=vmem, size = 0x1000, scoped, tag = 'input window, operand 0, single buffered']
    #allocation3 [shape = 's32[1]{0}', space=sflag, size = 0x4, scoped, tag = 'scoped memory for tpu_custom_call.1']
    #allocation4 [shape = 's32[1]{0}', space=sflag, size = 0x4, scoped, tag = 'scoped memory for tpu_custom_call.1']
    #allocation5 [shape = 'u8[65536]{0}', space=vmem, size = 0x10000, scoped, tag = 'input window, operand 1, single buffered']
    #allocation6 [shape = 's32[1]{0}', space=sflag, size = 0x4, scoped, tag = 'scoped memory for tpu_custom_call.1']
    #allocation7 [shape = 'u8[65536]{0}', space=vmem, size = 0x10000, scoped, tag = 'input window, operand 5, single buffered']
    #allocation8 [shape = 'u8[65536]{0}', space=vmem, size = 0x10000, scoped, tag = 'input window, operand 9, single buffered']
    #allocation9 [shape = 's32[1]{0}', space=sflag, size = 0x4, scoped, tag = 'scoped memory for tpu_custom_call.1']
    #allocation10 [shape = 'u8[4096]{0}', space=vmem, size = 0x1000, scoped, tag = 'output window, operand 0, single buffered']
    %16 = vsyncpa [#allocation3], 0
    %17 = vsyncpa [#allocation6], 0
    %18 = vsyncpa [#allocation9], 0
    %19 = vsyncpa [#allocation4], 0
    // Predicated region
    $region2: #{tpu_custom_call.1} parent=1 // pred_check
      _
    $region3: #{tpu_custom_call.1} parent=1 // pred_check_branch
      %21 = sbr.rel (0) target = $region5
    $region4: #{tpu_custom_call.1} parent=1 // pred_region
      %23 = vsyncadd [#allocation3], 0
      %s25 = sshll.u32 %s0, 4
      %s26 = int_to_ptr.hbm [resolvable:$true] %s25
      %s27 = sshll.u32 [#allocation2], 4
      %s28 = int_to_ptr.vmem [resolvable:$true] %s27
      %30 = dma.hbm_to_vmem [thread:$0]  %s26, 128, %s28, [#allocation3]
    $region5: #{tpu_custom_call.1} parent=1 // pred_fallthru
      _
    // Predicated region
    $region6: #{tpu_custom_call.1} parent=1 // pred_check
      _
    $region7: #{tpu_custom_call.1} parent=1 // pred_check_branch
      %32 = sbr.rel (0) target = $region9
    $region8: #{tpu_custom_call.1} parent=1 // pred_region
      %34 = vsyncadd [#allocation6], 0
      %s35 = sshll.u32 %s1, 4
      %s36 = int_to_ptr.hbm [resolvable:$true] %s35
      %s37 = sshll.u32 [#allocation5], 4
      %s38 = int_to_ptr.vmem [resolvable:$true] %s37
      %43 = dma.hbm_to_vmem [thread:$0]  %s36, 2048, %s38, [#allocation6], 128, 128, 8
    $region9: #{tpu_custom_call.1} parent=1 // pred_fallthru
      _
    // Predicated region
    $region10: #{tpu_custom_call.1} parent=1 // pred_check
      _
    $region11: #{tpu_custom_call.1} parent=1 // pred_check_branch
      %45 = sbr.rel (0) target = $region13
    $region12: #{tpu_custom_call.1} parent=1 // pred_region
      _
    $region13: #{tpu_custom_call.1} parent=1 // pred_fallthru
      _
    // Predicated region
    $region14: #{tpu_custom_call.1} parent=1 // pred_check
      _
    $region15: #{tpu_custom_call.1} parent=1 // pred_check_branch
      %47 = sbr.rel (0) target = $region17
    $region16: #{tpu_custom_call.1} parent=1 // pred_region
      _
    $region17: #{tpu_custom_call.1} parent=1 // pred_fallthru
      _
    // Predicated region
    $region18: #{tpu_custom_call.1} parent=1 // pred_check
      _
    $region19: #{tpu_custom_call.1} parent=1 // pred_check_branch
      %49 = sbr.rel (0) target = $region21
    $region20: #{tpu_custom_call.1} parent=1 // pred_region
      _
    $region21: #{tpu_custom_call.1} parent=1 // pred_fallthru
      _
    // Predicated region
    $region22: #{tpu_custom_call.1} parent=1 // pred_check
      _
    $region23: #{tpu_custom_call.1} parent=1 // pred_check_branch
      %51 = sbr.rel (0) target = $region25
    $region24: #{tpu_custom_call.1} parent=1 // pred_region
      %53 = vsyncadd [#allocation6], 0
      %s54 = sshll.u32 %s5, 4
      %s55 = int_to_ptr.hbm [resolvable:$true] %s54
      %s56 = sshll.u32 [#allocation7], 4
      %s57 = int_to_ptr.vmem [resolvable:$true] %s56
      %62 = dma.hbm_to_vmem [thread:$0]  %s55, 2048, %s57, [#allocation6], 128, 128, 8
    $region25: #{tpu_custom_call.1} parent=1 // pred_fallthru
      _
    // Predicated region
    $region26: #{tpu_custom_call.1} parent=1 // pred_check
      _
    $region27: #{tpu_custom_call.1} parent=1 // pred_check_branch
      %64 = sbr.rel (0) target = $region29
    $region28: #{tpu_custom_call.1} parent=1 // pred_region
      _
    $region29: #{tpu_custom_call.1} parent=1 // pred_fallthru
      _
    // Predicated region
    $region30: #{tpu_custom_call.1} parent=1 // pred_check
      _
    $region31: #{tpu_custom_call.1} parent=1 // pred_check_branch
      %66 = sbr.rel (0) target = $region33
    $region32: #{tpu_custom_call.1} parent=1 // pred_region
      _
    $region33: #{tpu_custom_call.1} parent=1 // pred_fallthru
      _
    // Predicated region
    $region34: #{tpu_custom_call.1} parent=1 // pred_check
      _
    $region35: #{tpu_custom_call.1} parent=1 // pred_check_branch
      %68 = sbr.rel (0) target = $region37
    $region36: #{tpu_custom_call.1} parent=1 // pred_region
      _
    $region37: #{tpu_custom_call.1} parent=1 // pred_fallthru
      _
    // Predicated region
    $region38: #{tpu_custom_call.1} parent=1 // pred_check
      _
    $region39: #{tpu_custom_call.1} parent=1 // pred_check_branch
      %70 = sbr.rel (0) target = $region41
    $region40: #{tpu_custom_call.1} parent=1 // pred_region
      %72 = vsyncadd [#allocation9], 0
      %s73 = sshll.u32 %s9, 4
      %s74 = int_to_ptr.hbm [resolvable:$true] %s73
      %s75 = sshll.u32 [#allocation8], 4
      %s76 = int_to_ptr.vmem [resolvable:$true] %s75
      %81 = dma.hbm_to_vmem [thread:$0]  %s74, 2048, %s76, [#allocation9], 128, 128, 8
    $region41: #{tpu_custom_call.1} parent=1 // pred_fallthru
      _
    // Predicated region
    $region42: #{tpu_custom_call.1} parent=1 // pred_check
      _
    $region43: #{tpu_custom_call.1} parent=1 // pred_check_branch
      %83 = sbr.rel (0) target = $region45
    $region44: #{tpu_custom_call.1} parent=1 // pred_region
      _
    $region45: #{tpu_custom_call.1} parent=1 // pred_fallthru
      _
    // Predicated region
    $region46: #{tpu_custom_call.1} parent=1 // pred_check
      _
    $region47: #{tpu_custom_call.1} parent=1 // pred_check_branch
      %85 = sbr.rel (0) target = $region49
    $region48: #{tpu_custom_call.1} parent=1 // pred_region
      %87 = dma.done [#allocation3], 128
    $region49: #{tpu_custom_call.1} parent=1 // pred_fallthru
      _
    // Predicated region
    $region50: #{tpu_custom_call.1} parent=1 // pred_check
      _
    $region51: #{tpu_custom_call.1} parent=1 // pred_check_branch
      %89 = sbr.rel (0) target = $region53
    $region52: #{tpu_custom_call.1} parent=1 // pred_region
      %91 = dma.done [#allocation6], 2048
    $region53: #{tpu_custom_call.1} parent=1 // pred_fallthru
      _
    // Predicated region
    $region54: #{tpu_custom_call.1} parent=1 // pred_check
      _
    $region55: #{tpu_custom_call.1} parent=1 // pred_check_branch
      %93 = sbr.rel (0) target = $region57
    $region56: #{tpu_custom_call.1} parent=1 // pred_region
      %95 = dma.done [#allocation6], 2048
    $region57: #{tpu_custom_call.1} parent=1 // pred_fallthru
      _
    // Predicated region
    $region58: #{tpu_custom_call.1} parent=1 // pred_check
      _
    $region59: #{tpu_custom_call.1} parent=1 // pred_check_branch
      %97 = sbr.rel (0) target = $region61
    $region60: #{tpu_custom_call.1} parent=1 // pred_region
      %99 = dma.done [#allocation9], 2048
    $region61: #{tpu_custom_call.1} parent=1 // pred_fallthru
      _
    %v100 = vld [vmem:[#allocation2] sm:$0xff]
    %101 = vadd.xlane.f32.xlu0 %v100
    %v102 = vpop.xlane.xlu0 %101
    %v103 = vmul.f32 %v102, 0.0625
    %v104 = vsub.f32 %v100, %v103
    %v105 = vlaneseq
    %v106 = vand.u32 %v105, 127
    %vm107 = vcmp.lt.s32.totalorder %v106, 16
    %v108 = vsel %vm107, 1, 0
    %vm109 = vcmp.eq.s32.totalorder %v108, 1
    %v110 = vsel %vm109, %v104, 0.0
    %v111 = vmul.f32 %v110, %v110
    %112 = vadd.xlane.f32.xlu0 %v111
    %v113 = vpop.xlane.xlu0 %112
    %v114 = vmul.f32 %v113, 0.0625
    %v115 = vadd.f32 %v114, 1e-05
    %v116 = vrsqrt.pop %v115
    %v117 = vmul.f32 %v116, %v115
    %v118 = vmul.f32 %v117, %v116
    %v119 = vmul.f32 0.5, %v118
    %v120 = vsub.f32 1.5, %v119
    %v121 = vmul.f32 %v116, %v120
    %vm122 = vweird.f32 %v115
    %vm123 = vweird.f32 %v116
    %vm124 = vmor %vm122, %vm123
    %v125 = vsel %vm124, %v116, %v121
    %v126 = vmul.f32 %v104, %v125
    %v127 = vld [vmem:[#allocation5] sm:$0xff]
    %v128 = vld [vmem:[#allocation5 + $0x8] sm:$0xff]
    %v129 = vld [vmem:[#allocation5 + $0x10] sm:$0xff]
    %v130 = vld [vmem:[#allocation5 + $0x18] sm:$0xff]
    %v131 = vld [vmem:[#allocation5 + $0x20] sm:$0xff]
    %v132 = vld [vmem:[#allocation5 + $0x28] sm:$0xff]
    %v133 = vld [vmem:[#allocation5 + $0x30] sm:$0xff]
    %v134 = vld [vmem:[#allocation5 + $0x38] sm:$0xff]
    %v135 = vld [vmem:[#allocation5 + $0x40] sm:$0xff]
    %v136 = vld [vmem:[#allocation5 + $0x48] sm:$0xff]
    %v137 = vld [vmem:[#allocation5 + $0x50] sm:$0xff]
    %v138 = vld [vmem:[#allocation5 + $0x58] sm:$0xff]
    %v139 = vld [vmem:[#allocation5 + $0x60] sm:$0xff]
    %v140 = vld [vmem:[#allocation5 + $0x68] sm:$0xff]
    %v141 = vld [vmem:[#allocation5 + $0x70] sm:$0xff]
    %v142 = vld [vmem:[#allocation5 + $0x78] sm:$0xff]
    %v143 = vld [vmem:[%s2] sm:$0x1]
    %v145 = vperm.slane %v143, 0
    %147 = vmatpush.msra.mxu0 %v142
    %148 = vmatpush.msra.mxu0 %v141
    %149 = vmatpush.msra.mxu0 %v140
    %150 = vmatpush.msra.mxu0 %v139
    %151 = vmatpush.msra.mxu0 %v138
    %152 = vmatpush.msra.mxu0 %v137
    %153 = vmatpush.msra.mxu0 %v136
    %154 = vmatpush.msra.mxu0 %v135
    %155 = vmatpush.msra.mxu0 %v134
    %156 = vmatpush.msra.mxu0 %v133
    %157 = vmatpush.msra.mxu0 %v132
    %158 = vmatpush.msra.mxu0 %v131
    %159 = vmatpush.msra.mxu0 %v130
    %160 = vmatpush.msra.mxu0 %v129
    %161 = vmatpush.msra.mxu0 %v128
    %162 = vmatpush.msra.mxu0 %v127
    %163 = vmatmul.f32.gmra.mxu0 %v126
    %v164 = vpop.f32.mrf.mxu0
    %v165 = vadd.f32 %v145, %v164
    %166 = vdwg.mxu0
    %167 = vadd.xlane.f32.xlu0 %v165
    %v168 = vpop.xlane.xlu0 %167
    %v169 = vmul.f32 %v168, 0.015625
    %v170 = vsub.f32 %v165, %v169
    %vm171 = vcmp.lt.s32.totalorder %v106, 64
    %v172 = vsel %vm171, 1, 0
    %vm173 = vcmp.eq.s32.totalorder %v172, 1
    %v174 = vsel %vm173, %v170, 0.0
    %v175 = vmul.f32 %v174, %v174
    %176 = vadd.xlane.f32.xlu0 %v175
    %v177 = vpop.xlane.xlu0 %176
    %v178 = vmul.f32 %v177, 0.015625
    %v179 = vadd.f32 %v178, 1e-05
    %v180 = vrsqrt.pop %v179
    %v181 = vmul.f32 %v180, %v179
    %v182 = vmul.f32 %v181, %v180
    %v183 = vmul.f32 0.5, %v182
    %v184 = vsub.f32 1.5, %v183
    %v185 = vmul.f32 %v180, %v184
    %vm186 = vweird.f32 %v179
    %vm187 = vweird.f32 %v180
    %vm188 = vmor %vm186, %vm187
    %v189 = vsel %vm188, %v180, %v185
    %v190 = vmul.f32 %v170, %v189
    %v191 = vld [vmem:[%s3] sm:$0x1]
    %v193 = vperm.slane %v191, 0
    %v195 = vmul.f32 %v190, %v193
    %v196 = vld [vmem:[%s4] sm:$0x1]
    %v198 = vperm.slane %v196, 0
    %v200 = vadd.f32 %v195, %v198
    %v201 = vmax.f32 %v200, 0.0
    %v202 = vld [vmem:[#allocation7] sm:$0xff]
    %v203 = vld [vmem:[#allocation7 + $0x8] sm:$0xff]
    %v204 = vld [vmem:[#allocation7 + $0x10] sm:$0xff]
    %v205 = vld [vmem:[#allocation7 + $0x18] sm:$0xff]
    %v206 = vld [vmem:[#allocation7 + $0x20] sm:$0xff]
    %v207 = vld [vmem:[#allocation7 + $0x28] sm:$0xff]
    %v208 = vld [vmem:[#allocation7 + $0x30] sm:$0xff]
    %v209 = vld [vmem:[#allocation7 + $0x38] sm:$0xff]
    %v210 = vld [vmem:[#allocation7 + $0x40] sm:$0xff]
    %v211 = vld [vmem:[#allocation7 + $0x48] sm:$0xff]
    %v212 = vld [vmem:[#allocation7 + $0x50] sm:$0xff]
    %v213 = vld [vmem:[#allocation7 + $0x58] sm:$0xff]
    %v214 = vld [vmem:[#allocation7 + $0x60] sm:$0xff]
    %v215 = vld [vmem:[#allocation7 + $0x68] sm:$0xff]
    %v216 = vld [vmem:[#allocation7 + $0x70] sm:$0xff]
    %v217 = vld [vmem:[#allocation7 + $0x78] sm:$0xff]
    %v218 = vld [vmem:[%s6] sm:$0x1]
    %v220 = vperm.slane %v218, 0
    %222 = vmatpush.msra.mxu0 %v217
    %223 = vmatpush.msra.mxu0 %v216
    %224 = vmatpush.msra.mxu0 %v215
    %225 = vmatpush.msra.mxu0 %v214
    %226 = vmatpush.msra.mxu0 %v213
    %227 = vmatpush.msra.mxu0 %v212
    %228 = vmatpush.msra.mxu0 %v211
    %229 = vmatpush.msra.mxu0 %v210
    %230 = vmatpush.msra.mxu0 %v209
    %231 = vmatpush.msra.mxu0 %v208
    %232 = vmatpush.msra.mxu0 %v207
    %233 = vmatpush.msra.mxu0 %v206
    %234 = vmatpush.msra.mxu0 %v205
    %235 = vmatpush.msra.mxu0 %v204
    %236 = vmatpush.msra.mxu0 %v203
    %237 = vmatpush.msra.mxu0 %v202
    %238 = vmatmul.f32.gmra.mxu0 %v201
    %v239 = vpop.f32.mrf.mxu0
    %v240 = vadd.f32 %v220, %v239
    %241 = vdwg.mxu0
    %242 = vadd.xlane.f32.xlu0 %v240
    %v243 = vpop.xlane.xlu0 %242
    %v244 = vmul.f32 %v243, 0.03125
    %v245 = vsub.f32 %v240, %v244
    %vm246 = vcmp.lt.s32.totalorder %v106, 32
    %v247 = vsel %vm246, 1, 0
    %vm248 = vcmp.eq.s32.totalorder %v247, 1
    %v249 = vsel %vm248, %v245, 0.0
    %v250 = vmul.f32 %v249, %v249
    %251 = vadd.xlane.f32.xlu0 %v250
    %v252 = vpop.xlane.xlu0 %251
    %v253 = vmul.f32 %v252, 0.03125
    %v254 = vadd.f32 %v253, 1e-05
    %v255 = vrsqrt.pop %v254
    %v256 = vmul.f32 %v255, %v254
    %v257 = vmul.f32 %v256, %v255
    %v258 = vmul.f32 0.5, %v257
    %v259 = vsub.f32 1.5, %v258
    %v260 = vmul.f32 %v255, %v259
    %vm261 = vweird.f32 %v254
    %vm262 = vweird.f32 %v255
    %vm263 = vmor %vm261, %vm262
    %v264 = vsel %vm263, %v255, %v260
    %v265 = vmul.f32 %v245, %v264
    %v266 = vld [vmem:[%s7] sm:$0x1]
    %v268 = vperm.slane %v266, 0
    %v270 = vmul.f32 %v265, %v268
    %v271 = vld [vmem:[%s8] sm:$0x1]
    %v273 = vperm.slane %v271, 0
    %v275 = vadd.f32 %v270, %v273
    %v276 = vmax.f32 %v275, 0.0
    %v277 = vld [vmem:[#allocation8] sm:$0xff]
    %v278 = vld [vmem:[#allocation8 + $0x8] sm:$0xff]
    %v279 = vld [vmem:[#allocation8 + $0x10] sm:$0xff]
    %v280 = vld [vmem:[#allocation8 + $0x18] sm:$0xff]
    %v281 = vld [vmem:[#allocation8 + $0x20] sm:$0xff]
    %v282 = vld [vmem:[#allocation8 + $0x28] sm:$0xff]
    %v283 = vld [vmem:[#allocation8 + $0x30] sm:$0xff]
    %v284 = vld [vmem:[#allocation8 + $0x38] sm:$0xff]
    %v285 = vld [vmem:[#allocation8 + $0x40] sm:$0xff]
    %v286 = vld [vmem:[#allocation8 + $0x48] sm:$0xff]
    %v287 = vld [vmem:[#allocation8 + $0x50] sm:$0xff]
    %v288 = vld [vmem:[#allocation8 + $0x58] sm:$0xff]
    %v289 = vld [vmem:[#allocation8 + $0x60] sm:$0xff]
    %v290 = vld [vmem:[#allocation8 + $0x68] sm:$0xff]
    %v291 = vld [vmem:[#allocation8 + $0x70] sm:$0xff]
    %v292 = vld [vmem:[#allocation8 + $0x78] sm:$0xff]
    %v293 = vld [vmem:[%s10] sm:$0x1]
    %v295 = vperm.slane %v293, 0
    %297 = vmatpush.msra.mxu0 %v292
    %298 = vmatpush.msra.mxu0 %v291
    %299 = vmatpush.msra.mxu0 %v290
    %300 = vmatpush.msra.mxu0 %v289
    %301 = vmatpush.msra.mxu0 %v288
    %302 = vmatpush.msra.mxu0 %v287
    %303 = vmatpush.msra.mxu0 %v286
    %304 = vmatpush.msra.mxu0 %v285
    %305 = vmatpush.msra.mxu0 %v284
    %306 = vmatpush.msra.mxu0 %v283
    %307 = vmatpush.msra.mxu0 %v282
    %308 = vmatpush.msra.mxu0 %v281
    %309 = vmatpush.msra.mxu0 %v280
    %310 = vmatpush.msra.mxu0 %v279
    %311 = vmatpush.msra.mxu0 %v278
    %312 = vmatpush.msra.mxu0 %v277
    %313 = vmatmul.f32.gmra.mxu0 %v276
    %v314 = vpop.f32.mrf.mxu0
    %v315 = vadd.f32 %v295, %v314
    %316 = vdwg.mxu0
    %v317 = vtanh.pop %v315
    %318 = vst [vmem:[#allocation10] sm:$0xff] %v317
    // Predicated region
    $region62: #{tpu_custom_call.1} parent=1 // pred_check
      _
    $region63: #{tpu_custom_call.1} parent=1 // pred_check_branch
      %320 = sbr.rel (0) target = $region65
    $region64: #{tpu_custom_call.1} parent=1 // pred_region
      %322 = vsyncadd [#allocation4], 0
      %s324 = sshll.u32 [#allocation10], 4
      %s325 = int_to_ptr.vmem [resolvable:$true] %s324
      %s326 = sshll.u32 %s11, 4
      %s327 = int_to_ptr.hbm [resolvable:$true] %s326
      %329 = dma.vmem_to_hbm [thread:$0]  %s325, 128, %s327, [#allocation4]
    $region65: #{tpu_custom_call.1} parent=1 // pred_fallthru
      _
    // Predicated region
    $region66: #{tpu_custom_call.1} parent=1 // pred_check
      _
    $region67: #{tpu_custom_call.1} parent=1 // pred_check_branch
      %331 = sbr.rel (0) target = $region69
    $region68: #{tpu_custom_call.1} parent=1 // pred_region
      %333 = dma.done [#allocation4], 128
    $region69: #{tpu_custom_call.1} parent=1 // pred_fallthru
      _
    %334 = vsyncpa [#allocation3], 1
    %335 = vsyncpa [#allocation6], 1
    %336 = vsyncpa [#allocation9], 1
    %337 = vsyncpa [#allocation4], 1

</llo_original>
